<compile_context>
chip_gen: v6e
topology: v6e:2x2x1
jax: 0.10.0
libtpu: 0.0.40
codegen_flags: <defaults>
</compile_context>

<pallas_src>
import functools

import jax
import jax.numpy as jnp
from jax.experimental import pallas as pl
from jax.experimental.pallas import tpu as pltpu

INPUT_DIM = 784
NUM_CLASSES = 10
C_PAD = 128          # lane-padded matmul output width (one MXU column block)
DEFAULT_TB = 4096    # batch tile (rows): bf16 x tile ~7 MiB (x2 buffers ~14 MiB),
                     # f32 x tile ~14 MiB (x2 ~28 MiB) -> vmem_limit_bytes raised.


def _round_up(n, m):
    return ((n + m - 1) // m) * m


def _cdiv(a, b):
    return (a + b - 1) // b


def _choose_tb(batch, tb_max, row_mult):
    """Batch-tile size: multiple of row_mult, <= tb_max; when the grid has >1
    step, prefer an even grid length so both v7x TensorCores stay busy under
    dimension_semantics=("parallel",)."""
    tb = min(tb_max, _round_up(max(batch, 1), row_mult))
    n = _cdiv(batch, tb)
    if n > 1 and n % 2 == 1:
        tb_even = _round_up(_cdiv(batch, n + 1), row_mult)
        if tb_even > 0 and _cdiv(batch, tb_even) % 2 == 0:
            tb = tb_even
    return tb


def _linear_kernel(x_ref, w_ref, b_ref, o_ref):
    # x_ref: (TB, D) f32/bf16, w_ref: (D, C_PAD) bf16, b_ref: (1, C_PAD) f32,
    # o_ref: (TB, NUM_CLASSES) f32.
    x = x_ref[...]
    if x.dtype != jnp.bfloat16:
        x = x.astype(jnp.bfloat16)            # VPU cast; keeps the MXU on the bf16 path
    acc = jnp.dot(x, w_ref[...], preferred_element_type=jnp.float32)   # (TB, C_PAD) f32
    acc = acc + b_ref[...]
    # Store only the valid classes; padded lanes never leave VMEM (no XLA slice).
    o_ref[...] = acc[:, : o_ref.shape[1]].astype(o_ref.dtype)


def prepare_params(weight, bias):
    """One-time parameter prep: PyTorch-layout weight (C, D) / bias (C,) ->
    pre-transposed, lane-padded bf16 weight (D, C_PAD) and f32 bias (1, C_PAD).
    Call once at init and reuse every forward."""
    C, D = weight.shape
    w_pad = jnp.zeros((D, C_PAD), jnp.bfloat16).at[:, :C].set(
        weight.T.astype(jnp.bfloat16))
    b_pad = jnp.zeros((1, C_PAD), jnp.float32).at[0, :C].set(
        bias.astype(jnp.float32))
    return w_pad, b_pad


@functools.partial(jax.jit, static_argnames=("num_classes", "tb"))
def softmax_regression_forward_prepped(x, w_pad, b_pad, *, num_classes=NUM_CLASSES,
                                       tb=DEFAULT_TB):
    """Forward pass with pre-prepped params. Returns (B, num_classes) f32 logits
    (scores *before* softmax, matching the PyTorch module).

    For peak HBM throughput feed x as bf16 (halves the dominant read stream);
    f32 x is also accepted and cast to bf16 inside the kernel (f32 accumulate)."""
    B, D = x.shape
    x_itemsize = jnp.dtype(x.dtype).itemsize
    row_mult = 16 if x_itemsize < 4 else 8     # bf16 sublane packing wants 16-row tiles
    TB = _choose_tb(B, tb, row_mult)
    grid = (_cdiv(B, TB),)

    # VMEM budget: double-buffered x tile + double-buffered (lane-padded) output
    # tile + resident weight/bias, with 25% headroom; capped at 64 MiB (v7x).
    d_lanes = _round_up(D, 128)
    vmem_need = (2 * TB * d_lanes * x_itemsize
                 + 2 * TB * C_PAD * 4
                 + 2 * d_lanes * C_PAD * jnp.dtype(w_pad.dtype).itemsize
                 + (1 << 20))
    vmem_limit = int(min(max(vmem_need + vmem_need // 4, 32 * 1024 * 1024),
                         64 * 1024 * 1024))

    cost = pl.CostEstimate(
        flops=2 * B * D * C_PAD,
        transcendentals=0,
        bytes_accessed=B * D * x_itemsize + D * C_PAD * 2 + B * num_classes * 4,
    )

    return pl.pallas_call(
        _linear_kernel,
        out_shape=jax.ShapeDtypeStruct((B, num_classes), jnp.float32),
        grid_spec=pltpu.PrefetchScalarGridSpec(
            num_scalar_prefetch=0,
            grid=grid,
            in_specs=[
                pl.BlockSpec((TB, D), lambda i: (i, 0)),        # stream x tiles
                pl.BlockSpec((D, C_PAD), lambda i: (0, 0)),     # weight stays resident
                pl.BlockSpec((1, C_PAD), lambda i: (0, 0)),     # bias stays resident
            ],
            out_specs=pl.BlockSpec((TB, num_classes), lambda i: (i, 0)),
        ),
        compiler_params=pltpu.CompilerParams(
            dimension_semantics=("parallel",),   # independent batch tiles (v7x 2 TCs)
            vmem_limit_bytes=vmem_limit,
        ),
        cost_estimate=cost,
    )(x, w_pad, b_pad)


def softmax_regression_forward(x, weight, bias):
    """Convenience wrapper from PyTorch-layout params (C, D) / (C,).
    NOTE: re-runs prepare_params every call; in a hot loop, call
    prepare_params() once and use softmax_regression_forward_prepped()."""
    w_pad, b_pad = prepare_params(weight, bias)
    return softmax_regression_forward_prepped(x, w_pad, b_pad,
                                              num_classes=weight.shape[0])


if __name__ == "__main__":
    key = jax.random.PRNGKey(0)
    k_x, k_w, k_b = jax.random.split(key, 3)

    B = 8  # small demo batch
    # Deterministic parameter init (mimics nn.Linear's U(-1/sqrt(D), 1/sqrt(D)))
    bound = 1.0 / (INPUT_DIM ** 0.5)
    weight = jax.random.uniform(k_w, (NUM_CLASSES, INPUT_DIM), jnp.float32,
                                minval=-bound, maxval=bound)
    bias = jax.random.uniform(k_b, (NUM_CLASSES,), jnp.float32,
                              minval=-bound, maxval=bound)
    x = jax.random.normal(k_x, (B, INPUT_DIM), jnp.float32)

    # Hoisted, one-time param prep (transpose + lane padding + bf16 cast).
    w_pad, b_pad = prepare_params(weight, bias)

    out = jax.block_until_ready(softmax_regression_forward_prepped(x, w_pad, b_pad))
    assert out.shape == (B, NUM_CLASSES)

    # References: (a) matching numerics (bf16 operands, f32 accumulate),
    #             (b) plain f32 with a loose tolerance.
    x16 = x.astype(jnp.bfloat16).astype(jnp.float32)
    w16 = weight.astype(jnp.bfloat16).astype(jnp.float32)
    ref_mixed = x16 @ w16.T + bias
    ref_f32 = x @ weight.T + bias
    assert jnp.allclose(out, ref_mixed, atol=2e-3, rtol=2e-3), \
        "mismatch vs bf16-operand / f32-accumulate reference"
    assert jnp.allclose(out, ref_f32, atol=5e-2, rtol=5e-2), \
        "mismatch vs f32 reference"

    # Extra robustness check: multi-tile grid with a partial last batch tile.
    B2 = 20
    x2 = jax.random.normal(jax.random.PRNGKey(1), (B2, INPUT_DIM), jnp.float32)
    out2 = jax.block_until_ready(
        softmax_regression_forward_prepped(x2, w_pad, b_pad, tb=8))
    ref2 = (x2.astype(jnp.bfloat16).astype(jnp.float32)) @ w16.T + bias
    assert out2.shape == (B2, NUM_CLASSES)
    assert jnp.allclose(out2, ref2, atol=2e-3, rtol=2e-3), \
        "mismatch on partial-tile batch"

    print("KERNEL_OK")
</pallas_src>

<mosaic_0001>
module attributes {stable_mosaic.version = 11 : i64} {
  func.func @_linear_kernel(%arg0: i32, %arg1: memref<8x784xf32, #tpu.memory_space<vmem>>, %arg2: memref<784x128xbf16, #tpu.memory_space<vmem>>, %arg3: memref<1x128xf32, #tpu.memory_space<vmem>>, %arg4: memref<8x10xf32, #tpu.memory_space<vmem>>) attributes {dimension_semantics = [#tpu.dimension_semantics<parallel>], iteration_bounds = array<i64: 1>, scalar_prefetch = 0 : i64, scratch_operands = 0 : i64, tpu.core_type = #tpu.core_type<tc>, window_params = [{transform_indices = @transform_0, window_bounds = array<i64: 8, 784>}, {pipeline_mode = #tpu.pipeline_mode<synchronous>, transform_indices = @transform_1, window_bounds = array<i64: 784, 128>}, {pipeline_mode = #tpu.pipeline_mode<synchronous>, transform_indices = @transform_2, window_bounds = array<i64: 1, 128>}, {transform_indices = @transform_3, window_bounds = array<i64: 8, 10>}]} {
    %c0 = arith.constant 0 : index
    %c0_0 = arith.constant 0 : index
    %0 = vector.load %arg1[%c0, %c0_0] : memref<8x784xf32, #tpu.memory_space<vmem>>, vector<8x784xf32>
    %1 = arith.truncf %0 : vector<8x784xf32> to vector<8x784xbf16>
    %c0_1 = arith.constant 0 : index
    %c0_2 = arith.constant 0 : index
    %2 = vector.load %arg2[%c0_1, %c0_2] : memref<784x128xbf16, #tpu.memory_space<vmem>>, vector<784x128xbf16>
    %cst = arith.constant dense<0.000000e+00> : vector<8x128xf32>
    %3 = tpu.matmul %1, %2, %cst {dimension_numbers = #tpu.dot_dimension_numbers<[1], [0], [0], [1], [0, 0, 1, 1], [], []>} : vector<8x784xbf16>, vector<784x128xbf16>, vector<8x128xf32> -> vector<8x128xf32>
    %c0_3 = arith.constant 0 : index
    %c0_4 = arith.constant 0 : index
    %4 = vector.load %arg3[%c0_3, %c0_4] : memref<1x128xf32, #tpu.memory_space<vmem>>, vector<1x128xf32>
    %5 = vector.broadcast %4 : vector<1x128xf32> to vector<8x128xf32>
    %6 = arith.addf %3, %5 : vector<8x128xf32>
    %7 = vector.extract_strided_slice %6 {offsets = [0, 0], sizes = [8, 10], strides = [1, 1]} : vector<8x128xf32> to vector<8x10xf32>
    %c0_5 = arith.constant 0 : index
    %c0_6 = arith.constant 0 : index
    %8 = vector.load %arg4[%c0_5, %c0_6] : memref<8x10xf32, #tpu.memory_space<vmem>>, vector<8x10xf32>
    tpu.vector_store %arg4[%c0_5, %c0_6], %7 {strides = array<i32>} : memref<8x10xf32, #tpu.memory_space<vmem>>, vector<8x10xf32>,
    return
  }
  func.func @transform_0(%arg0: i32) -> (i32, i32) {
    %c0_i32 = arith.constant 0 : i32
    %c0_i32_0 = arith.constant 0 : i32
    return %arg0, %c0_i32 : i32, i32
  }
  func.func @transform_1(%arg0: i32) -> (i32, i32) {
    %c0_i32 = arith.constant 0 : i32
    %c0_i32_0 = arith.constant 0 : i32
    %c0_i32_1 = arith.constant 0 : i32
    return %c0_i32, %c0_i32_0 : i32, i32
  }
  func.func @transform_2(%arg0: i32) -> (i32, i32) {
    %c0_i32 = arith.constant 0 : i32
    %c0_i32_0 = arith.constant 0 : i32
    %c0_i32_1 = arith.constant 0 : i32
    return %c0_i32, %c0_i32_0 : i32, i32
  }
  func.func @transform_3(%arg0: i32) -> (i32, i32) {
    %c0_i32 = arith.constant 0 : i32
    %c0_i32_0 = arith.constant 0 : i32
    return %arg0, %c0_i32 : i32, i32
  }
}

</mosaic_0001>

<llo_original>
// kernel: softmax_regression_forward_prepped.1
$region0: #{softmax_regression_forward_prepped.1}
  #allocation0 [shape = 'u32[]', space=smem, size = 0x4, offset = 0x4, fixed_abs, tag = 'smem constant byte address 0x4 - core index']
  #allocation1 [shape = 'u32[144,128]{1,0:T(1,128)}', space=vmem, size = 0x12000, scoped, tag = 'internal scratch']
  %s0 = inlined_call_operand.hbm [shape: f32[8,784], index: 0, kind: input, shape index: {}]
  %s1 = inlined_call_operand.hbm [shape: bf16[784,128], index: 1, kind: input, shape index: {}]
  %s2 = inlined_call_operand.vmem [shape: f32[1,128], index: 2, kind: input, shape index: {}]
  %s3 = inlined_call_operand.hbm [shape: f32[8,10], index: 3, kind: output, shape index: {}]
  %s4 = sld [smem:[#allocation0]]
  $region30: #{softmax_regression_forward_prepped.1} parent=0
    _
  %s6 = ssub.s32 1, %s4
  %s7 = scalar_select 0, %s6, %s4
  $region1: #{softmax_regression_forward_prepped.1} parent=0
    #allocation2 [shape = 'u8[28672]{0}', space=vmem, size = 0x7000, scoped, tag = 'input window, operand 0, single buffered']
    #allocation3 [shape = 's32[1]{0}', space=sflag, size = 0x4, scoped, tag = 'scoped memory for softmax_regression_forward_prepped.1']
    #allocation4 [shape = 's32[1]{0}', space=sflag, size = 0x4, scoped, tag = 'scoped memory for softmax_regression_forward_prepped.1']
    #allocation5 [shape = 'u8[200704]{0}', space=vmem, size = 0x31000, scoped, tag = 'input window, operand 1, single buffered']
    #allocation6 [shape = 's32[1]{0}', space=sflag, size = 0x4, scoped, tag = 'scoped memory for softmax_regression_forward_prepped.1']
    #allocation7 [shape = 'u8[4096]{0}', space=vmem, size = 0x1000, scoped, tag = 'output window, operand 0, single buffered']
    %8 = vsyncpa [#allocation3], 0
    %9 = vsyncpa [#allocation6], 0
    %10 = vsyncpa [#allocation4], 0
    // Predicated region
    $region2: #{softmax_regression_forward_prepped.1} parent=1 // pred_check
      _
    $region3: #{softmax_regression_forward_prepped.1} parent=1 // pred_check_branch
      %12 = sbr.rel (0) target = $region5
    $region4: #{softmax_regression_forward_prepped.1} parent=1 // pred_region
      %s14 = ssub.s32 896, 896
      %15 = vsyncadd [#allocation3], %s14
      %s17 = sshll.u32 [#allocation2], 4
      %s18 = int_to_ptr.vmem [resolvable:$true] %s17
      %20 = dma.hbm_to_vmem [thread:$0]  %s0, 896, %s18, [#allocation3]
    $region5: #{softmax_regression_forward_prepped.1} parent=1 // pred_fallthru
      _
    // Predicated region
    $region6: #{softmax_regression_forward_prepped.1} parent=1 // pred_check
      _
    $region7: #{softmax_regression_forward_prepped.1} parent=1 // pred_check_branch
      %22 = sbr.rel (0) target = $region9
    $region8: #{softmax_regression_forward_prepped.1} parent=1 // pred_region
      %s24 = ssub.s32 6272, 6272
      %25 = vsyncadd [#allocation6], %s24
      %s26 = sshll.u32 [#allocation5], 4
      %s27 = int_to_ptr.vmem [resolvable:$true] %s26
      %32 = dma.hbm_to_vmem [thread:$0]  %s1, 6272, %s27, [#allocation6], 64, 64, 4
    $region9: #{softmax_regression_forward_prepped.1} parent=1 // pred_fallthru
      _
    // Predicated region
    $region10: #{softmax_regression_forward_prepped.1} parent=1 // pred_check
      _
    $region11: #{softmax_regression_forward_prepped.1} parent=1 // pred_check_branch
      %34 = sbr.rel (0) target = $region13
    $region12: #{softmax_regression_forward_prepped.1} parent=1 // pred_region
      _
    $region13: #{softmax_regression_forward_prepped.1} parent=1 // pred_fallthru
      _
    // Predicated region
    $region14: #{softmax_regression_forward_prepped.1} parent=1 // pred_check
      _
    $region15: #{softmax_regression_forward_prepped.1} parent=1 // pred_check_branch
      %36 = sbr.rel (0) target = $region17
    $region16: #{softmax_regression_forward_prepped.1} parent=1 // pred_region
      %37 = dma.done [#allocation3], 896
    $region17: #{softmax_regression_forward_prepped.1} parent=1 // pred_fallthru
      _
    // Predicated region
    $region18: #{softmax_regression_forward_prepped.1} parent=1 // pred_check
      _
    $region19: #{softmax_regression_forward_prepped.1} parent=1 // pred_check_branch
      %39 = sbr.rel (0) target = $region21
    $region20: #{softmax_regression_forward_prepped.1} parent=1 // pred_region
      %40 = dma.done [#allocation6], 6272
    $region21: #{softmax_regression_forward_prepped.1} parent=1 // pred_fallthru
      _
    %v42 = vld [vmem:[#allocation2] sm:$0xff]
    %v43 = vld [vmem:[#allocation2 + $0x8] sm:$0xff]
    %v44 = vld [vmem:[#allocation2 + $0x10] sm:$0xff]
    %v45 = vld [vmem:[#allocation2 + $0x18] sm:$0xff]
    %v46 = vld [vmem:[#allocation2 + $0x20] sm:$0xff]
    %v47 = vld [vmem:[#allocation2 + $0x28] sm:$0xff]
    %v48 = vld [vmem:[#allocation2 + $0x30] sm:$0xff]
    %v49 = vpack.c.bf16 %v42, %v42
    %v50 = vpack.c.bf16 %v43, %v43
    %v51 = vpack.c.bf16 %v44, %v44
    %v52 = vpack.c.bf16 %v45, %v45
    %v53 = vpack.c.bf16 %v46, %v46
    %v54 = vpack.c.bf16 %v47, %v47
    %v55 = vpack.c.bf16 %v48, %v48
    %v56 = vld [vmem:[#allocation5] sm:$0xf]
    %v57 = vld [vmem:[#allocation5 + $0x4] sm:$0xf]
    %v58 = vld [vmem:[#allocation5 + $0x8] sm:$0xf]
    %v59 = vld [vmem:[#allocation5 + $0xc] sm:$0xf]
    %v60 = vld [vmem:[#allocation5 + $0x10] sm:$0xf]
    %v61 = vld [vmem:[#allocation5 + $0x14] sm:$0xf]
    %v62 = vld [vmem:[#allocation5 + $0x18] sm:$0xf]
    %v63 = vld [vmem:[#allocation5 + $0x1c] sm:$0xf]
    %v64 = vld [vmem:[#allocation5 + $0x20] sm:$0xf]
    %v65 = vld [vmem:[#allocation5 + $0x24] sm:$0xf]
    %v66 = vld [vmem:[#allocation5 + $0x28] sm:$0xf]
    %v67 = vld [vmem:[#allocation5 + $0x2c] sm:$0xf]
    %v68 = vld [vmem:[#allocation5 + $0x30] sm:$0xf]
    %v69 = vld [vmem:[#allocation5 + $0x34] sm:$0xf]
    %v70 = vld [vmem:[#allocation5 + $0x38] sm:$0xf]
    %v71 = vld [vmem:[#allocation5 + $0x3c] sm:$0xf]
    %v72 = vld [vmem:[#allocation5 + $0x40] sm:$0xf]
    %v73 = vld [vmem:[#allocation5 + $0x44] sm:$0xf]
    %v74 = vld [vmem:[#allocation5 + $0x48] sm:$0xf]
    %v75 = vld [vmem:[#allocation5 + $0x4c] sm:$0xf]
    %v76 = vld [vmem:[#allocation5 + $0x50] sm:$0xf]
    %v77 = vld [vmem:[#allocation5 + $0x54] sm:$0xf]
    %v78 = vld [vmem:[#allocation5 + $0x58] sm:$0xf]
    %v79 = vld [vmem:[#allocation5 + $0x5c] sm:$0xf]
    %v80 = vld [vmem:[#allocation5 + $0x60] sm:$0xf]
    %v81 = vld [vmem:[#allocation5 + $0x64] sm:$0xf]
    %v82 = vld [vmem:[#allocation5 + $0x68] sm:$0xf]
    %v83 = vld [vmem:[#allocation5 + $0x6c] sm:$0xf]
    %v84 = vld [vmem:[#allocation5 + $0x70] sm:$0xf]
    %v85 = vld [vmem:[#allocation5 + $0x74] sm:$0xf]
    %v86 = vld [vmem:[#allocation5 + $0x78] sm:$0xf]
    %v87 = vld [vmem:[#allocation5 + $0x7c] sm:$0xf]
    %v88 = vld [vmem:[#allocation5 + $0x80] sm:$0xf]
    %v89 = vld [vmem:[#allocation5 + $0x84] sm:$0xf]
    %v90 = vld [vmem:[#allocation5 + $0x88] sm:$0xf]
    %v91 = vld [vmem:[#allocation5 + $0x8c] sm:$0xf]
    %v92 = vld [vmem:[#allocation5 + $0x90] sm:$0xf]
    %v93 = vld [vmem:[#allocation5 + $0x94] sm:$0xf]
    %v94 = vld [vmem:[#allocation5 + $0x98] sm:$0xf]
    %v95 = vld [vmem:[#allocation5 + $0x9c] sm:$0xf]
    %v96 = vld [vmem:[#allocation5 + $0xa0] sm:$0xf]
    %v97 = vld [vmem:[#allocation5 + $0xa4] sm:$0xf]
    %v98 = vld [vmem:[#allocation5 + $0xa8] sm:$0xf]
    %v99 = vld [vmem:[#allocation5 + $0xac] sm:$0xf]
    %v100 = vld [vmem:[#allocation5 + $0xb0] sm:$0xf]
    %v101 = vld [vmem:[#allocation5 + $0xb4] sm:$0xf]
    %v102 = vld [vmem:[#allocation5 + $0xb8] sm:$0xf]
    %v103 = vld [vmem:[#allocation5 + $0xbc] sm:$0xf]
    %v104 = vld [vmem:[#allocation5 + $0xc0] sm:$0xf]
    %v105 = vld [vmem:[#allocation5 + $0xc4] sm:$0xf]
    %v106 = vld [vmem:[#allocation5 + $0xc8] sm:$0xf]
    %v107 = vld [vmem:[#allocation5 + $0xcc] sm:$0xf]
    %v108 = vld [vmem:[#allocation5 + $0xd0] sm:$0xf]
    %v109 = vld [vmem:[#allocation5 + $0xd4] sm:$0xf]
    %v110 = vld [vmem:[#allocation5 + $0xd8] sm:$0xf]
    %v111 = vld [vmem:[#allocation5 + $0xdc] sm:$0xf]
    %v112 = vld [vmem:[#allocation5 + $0xe0] sm:$0xf]
    %v113 = vld [vmem:[#allocation5 + $0xe4] sm:$0xf]
    %v114 = vld [vmem:[#allocation5 + $0xe8] sm:$0xf]
    %v115 = vld [vmem:[#allocation5 + $0xec] sm:$0xf]
    %v116 = vld [vmem:[#allocation5 + $0xf0] sm:$0xf]
    %v117 = vld [vmem:[#allocation5 + $0xf4] sm:$0xf]
    %v118 = vld [vmem:[#allocation5 + $0xf8] sm:$0xf]
    %v119 = vld [vmem:[#allocation5 + $0xfc] sm:$0xf]
    %v120 = vld [vmem:[#allocation5 + $0x100] sm:$0xf]
    %v121 = vld [vmem:[#allocation5 + $0x104] sm:$0xf]
    %v122 = vld [vmem:[#allocation5 + $0x108] sm:$0xf]
    %v123 = vld [vmem:[#allocation5 + $0x10c] sm:$0xf]
    %v124 = vld [vmem:[#allocation5 + $0x110] sm:$0xf]
    %v125 = vld [vmem:[#allocation5 + $0x114] sm:$0xf]
    %v126 = vld [vmem:[#allocation5 + $0x118] sm:$0xf]
    %v127 = vld [vmem:[#allocation5 + $0x11c] sm:$0xf]
    %v128 = vld [vmem:[#allocation5 + $0x120] sm:$0xf]
    %v129 = vld [vmem:[#allocation5 + $0x124] sm:$0xf]
    %v130 = vld [vmem:[#allocation5 + $0x128] sm:$0xf]
    %v131 = vld [vmem:[#allocation5 + $0x12c] sm:$0xf]
    %v132 = vld [vmem:[#allocation5 + $0x130] sm:$0xf]
    %v133 = vld [vmem:[#allocation5 + $0x134] sm:$0xf]
    %v134 = vld [vmem:[#allocation5 + $0x138] sm:$0xf]
    %v135 = vld [vmem:[#allocation5 + $0x13c] sm:$0xf]
    %v136 = vld [vmem:[#allocation5 + $0x140] sm:$0xf]
    %v137 = vld [vmem:[#allocation5 + $0x144] sm:$0xf]
    %v138 = vld [vmem:[#allocation5 + $0x148] sm:$0xf]
    %v139 = vld [vmem:[#allocation5 + $0x14c] sm:$0xf]
    %v140 = vld [vmem:[#allocation5 + $0x150] sm:$0xf]
    %v141 = vld [vmem:[#allocation5 + $0x154] sm:$0xf]
    %v142 = vld [vmem:[#allocation5 + $0x158] sm:$0xf]
    %v143 = vld [vmem:[#allocation5 + $0x15c] sm:$0xf]
    %v144 = vld [vmem:[#allocation5 + $0x160] sm:$0xf]
    %v145 = vld [vmem:[#allocation5 + $0x164] sm:$0xf]
    %v146 = vld [vmem:[#allocation5 + $0x168] sm:$0xf]
    %v147 = vld [vmem:[#allocation5 + $0x16c] sm:$0xf]
    %v148 = vld [vmem:[#allocation5 + $0x170] sm:$0xf]
    %v149 = vld [vmem:[#allocation5 + $0x174] sm:$0xf]
    %v150 = vld [vmem:[#allocation5 + $0x178] sm:$0xf]
    %v151 = vld [vmem:[#allocation5 + $0x17c] sm:$0xf]
    %v152 = vld [vmem:[#allocation5 + $0x180] sm:$0xf]
    %v153 = vld [vmem:[#allocation5 + $0x184] sm:$0xf]
    %v154 = vld [vmem:[%s2] sm:$0x1]
    %v156 = vlaneseq
    %v157 = vshrl.u32 %v156, 7
    %v158 = vsub.s32 0, %v157
    %v159 = vrot.slane %v154, %v158
    %v259 = vunpack.c.l.b16 %v56
    %v260 = vunpack.c.l.b16 %v57
    %v261 = vunpack.c.l.b16 %v58
    %v262 = vunpack.c.l.b16 %v59
    %v263 = vunpack.c.l.b16 %v60
    %v264 = vunpack.c.l.b16 %v61
    %v265 = vunpack.c.l.b16 %v62
    %v266 = vunpack.c.l.b16 %v63
    %v267 = vunpack.c.l.b16 %v64
    %v268 = vunpack.c.l.b16 %v65
    %v269 = vunpack.c.l.b16 %v66
    %v270 = vunpack.c.l.b16 %v67
    %v271 = vunpack.c.l.b16 %v68
    %v272 = vunpack.c.l.b16 %v69
    %v273 = vunpack.c.l.b16 %v70
    %v274 = vunpack.c.l.b16 %v71
    %v275 = vunpack.c.l.b16 %v72
    %v276 = vunpack.c.l.b16 %v73
    %v277 = vunpack.c.l.b16 %v74
    %v278 = vunpack.c.l.b16 %v75
    %v279 = vunpack.c.l.b16 %v76
    %v280 = vunpack.c.l.b16 %v77
    %v281 = vunpack.c.l.b16 %v78
    %v282 = vunpack.c.l.b16 %v79
    %v283 = vunpack.c.l.b16 %v80
    %v284 = vunpack.c.l.b16 %v81
    %v285 = vunpack.c.l.b16 %v82
    %v286 = vunpack.c.l.b16 %v83
    %v287 = vunpack.c.l.b16 %v84
    %v288 = vunpack.c.l.b16 %v85
    %v289 = vunpack.c.l.b16 %v86
    %v290 = vunpack.c.l.b16 %v87
    %v291 = vunpack.c.l.b16 %v88
    %v292 = vunpack.c.l.b16 %v89
    %v293 = vunpack.c.l.b16 %v90
    %v294 = vunpack.c.l.b16 %v91
    %v295 = vunpack.c.l.b16 %v92
    %v296 = vunpack.c.l.b16 %v93
    %v297 = vunpack.c.l.b16 %v94
    %v298 = vunpack.c.l.b16 %v95
    %v299 = vunpack.c.l.b16 %v96
    %v300 = vunpack.c.l.b16 %v97
    %v301 = vunpack.c.l.b16 %v98
    %v302 = vunpack.c.l.b16 %v99
    %v303 = vunpack.c.l.b16 %v100
    %v304 = vunpack.c.l.b16 %v101
    %v305 = vunpack.c.l.b16 %v102
    %v306 = vunpack.c.l.b16 %v103
    %v307 = vunpack.c.l.b16 %v104
    %v308 = vunpack.c.l.b16 %v105
    %v309 = vunpack.c.l.b16 %v106
    %v310 = vunpack.c.l.b16 %v107
    %v311 = vunpack.c.l.b16 %v108
    %v312 = vunpack.c.l.b16 %v109
    %v313 = vunpack.c.l.b16 %v110
    %v314 = vunpack.c.l.b16 %v111
    %v315 = vunpack.c.l.b16 %v112
    %v316 = vunpack.c.l.b16 %v113
    %v317 = vunpack.c.l.b16 %v114
    %v318 = vunpack.c.l.b16 %v115
    %v319 = vunpack.c.l.b16 %v116
    %v320 = vunpack.c.l.b16 %v117
    %v321 = vunpack.c.l.b16 %v118
    %v322 = vunpack.c.l.b16 %v119
    %v323 = vunpack.c.l.b16 %v120
    %v324 = vunpack.c.l.b16 %v121
    %v325 = vunpack.c.l.b16 %v122
    %v326 = vunpack.c.l.b16 %v123
    %v327 = vunpack.c.l.b16 %v124
    %v328 = vunpack.c.l.b16 %v125
    %v329 = vunpack.c.l.b16 %v126
    %v330 = vunpack.c.l.b16 %v127
    %v331 = vunpack.c.l.b16 %v128
    %v332 = vunpack.c.l.b16 %v129
    %v333 = vunpack.c.l.b16 %v130
    %v334 = vunpack.c.l.b16 %v131
    %v335 = vunpack.c.l.b16 %v132
    %v336 = vunpack.c.l.b16 %v133
    %v337 = vunpack.c.l.b16 %v134
    %v338 = vunpack.c.l.b16 %v135
    %v339 = vunpack.c.l.b16 %v136
    %v340 = vunpack.c.l.b16 %v137
    %v341 = vunpack.c.l.b16 %v138
    %v342 = vunpack.c.l.b16 %v139
    %v343 = vunpack.c.l.b16 %v140
    %v344 = vunpack.c.l.b16 %v141
    %v345 = vunpack.c.l.b16 %v142
    %v346 = vunpack.c.l.b16 %v143
    %v347 = vunpack.c.l.b16 %v144
    %v348 = vunpack.c.l.b16 %v145
    %v349 = vunpack.c.l.b16 %v146
    %v350 = vunpack.c.l.b16 %v147
    %v351 = vunpack.c.l.b16 %v148
    %v352 = vunpack.c.l.b16 %v149
    %v353 = vunpack.c.l.b16 %v150
    %v354 = vunpack.c.l.b16 %v151
    %v355 = vunpack.c.l.b16 %v152
    %v356 = vunpack.c.l.b16 %v153
    %v357 = vpack.c.b16 %v260, %v259
    %v358 = vpack.c.b16 %v262, %v261
    %v359 = vpack.c.b16 %v264, %v263
    %v360 = vpack.c.b16 %v266, %v265
    %v361 = vpack.c.b16 %v268, %v267
    %v362 = vpack.c.b16 %v270, %v269
    %v363 = vpack.c.b16 %v272, %v271
    %v364 = vpack.c.b16 %v274, %v273
    %v365 = vpack.c.b16 %v276, %v275
    %v366 = vpack.c.b16 %v278, %v277
    %v367 = vpack.c.b16 %v280, %v279
    %v368 = vpack.c.b16 %v282, %v281
    %v369 = vpack.c.b16 %v284, %v283
    %v370 = vpack.c.b16 %v286, %v285
    %v371 = vpack.c.b16 %v288, %v287
    %v372 = vpack.c.b16 %v290, %v289
    %v373 = vpack.c.b16 %v292, %v291
    %v374 = vpack.c.b16 %v294, %v293
    %v375 = vpack.c.b16 %v296, %v295
    %v376 = vpack.c.b16 %v298, %v297
    %v377 = vpack.c.b16 %v300, %v299
    %v378 = vpack.c.b16 %v302, %v301
    %v379 = vpack.c.b16 %v304, %v303
    %v380 = vpack.c.b16 %v306, %v305
    %v381 = vpack.c.b16 %v308, %v307
    %v382 = vpack.c.b16 %v310, %v309
    %v383 = vpack.c.b16 %v312, %v311
    %v384 = vpack.c.b16 %v314, %v313
    %v385 = vpack.c.b16 %v316, %v315
    %v386 = vpack.c.b16 %v318, %v317
    %v387 = vpack.c.b16 %v320, %v319
    %v388 = vpack.c.b16 %v322, %v321
    %v389 = vpack.c.b16 %v324, %v323
    %v390 = vpack.c.b16 %v326, %v325
    %v391 = vpack.c.b16 %v328, %v327
    %v392 = vpack.c.b16 %v330, %v329
    %v393 = vpack.c.b16 %v332, %v331
    %v394 = vpack.c.b16 %v334, %v333
    %v395 = vpack.c.b16 %v336, %v335
    %v396 = vpack.c.b16 %v338, %v337
    %v397 = vpack.c.b16 %v340, %v339
    %v398 = vpack.c.b16 %v342, %v341
    %v399 = vpack.c.b16 %v344, %v343
    %v400 = vpack.c.b16 %v346, %v345
    %v401 = vpack.c.b16 %v348, %v347
    %v402 = vpack.c.b16 %v350, %v349
    %v403 = vpack.c.b16 %v352, %v351
    %v404 = vpack.c.b16 %v354, %v353
    %v405 = vpack.c.b16 %v356, %v355
    %vm455 = vcmask 130048
    %v457 = vsel %vm455, %v55, 0
    %459 = vmatprep.subr.bf16.mxu0 0
    %460 = vmatpush1.bf16.msra.mxu0 %v364
    %461 = vmatprep.subr.bf16.mxu0 0
    %462 = vmatpush1.bf16.msra.mxu0 %v363
    %463 = vmatprep.subr.bf16.mxu0 0
    %464 = vmatpush1.bf16.msra.mxu0 %v362
    %465 = vmatprep.subr.bf16.mxu0 0
    %466 = vmatpush1.bf16.msra.mxu0 %v361
    %467 = vmatprep.subr.bf16.mxu0 0
    %468 = vmatpush1.bf16.msra.mxu0 %v360
    %469 = vmatprep.subr.bf16.mxu0 0
    %470 = vmatpush1.bf16.msra.mxu0 %v359
    %471 = vmatprep.subr.bf16.mxu0 0
    %472 = vmatpush1.bf16.msra.mxu0 %v358
    %473 = vmatprep.subr.bf16.mxu0 0
    %474 = vmatpush1.bf16.msra.mxu0 %v357
    %475 = vmatprep.subr.bf16.mxu0 0
    %476 = vmatpush2.bf16.msra.mxu0 %v372
    %477 = vmatprep.subr.bf16.mxu0 0
    %478 = vmatpush2.bf16.msra.mxu0 %v371
    %479 = vmatprep.subr.bf16.mxu0 0
    %480 = vmatpush2.bf16.msra.mxu0 %v370
    %481 = vmatprep.subr.bf16.mxu0 0
    %482 = vmatpush2.bf16.msra.mxu0 %v369
    %483 = vmatprep.subr.bf16.mxu0 0
    %484 = vmatpush2.bf16.msra.mxu0 %v368
    %485 = vmatprep.subr.bf16.mxu0 0
    %486 = vmatpush2.bf16.msra.mxu0 %v367
    %487 = vmatprep.subr.bf16.mxu0 0
    %488 = vmatpush2.bf16.msra.mxu0 %v366
    %489 = vmatprep.subr.bf16.mxu0 0
    %490 = vmatpush2.bf16.msra.mxu0 %v365
    %491 = vmatprep.mubr.bf16.mxu0 %v50
    %492 = vmatmul.mubr.bf16.gmra.mxu0 %v49
    %v493 = vpop.f32.mrf.mxu0
    %v494 = vadd.f32 %v159, %v493
    %v495 = vpop.f32.mrf.mxu0
    %v496 = vpop.f32.mrf.mxu0
    %v497 = vpop.f32.mrf.mxu0
    %498 = vdwg.mxu0
    %499 = vmatprep.subr.bf16.mxu0 0
    %500 = vmatpush1.bf16.msra.mxu0 %v380
    %501 = vmatprep.subr.bf16.mxu0 0
    %502 = vmatpush1.bf16.msra.mxu0 %v379
    %503 = vmatprep.subr.bf16.mxu0 0
    %504 = vmatpush1.bf16.msra.mxu0 %v378
    %505 = vmatprep.subr.bf16.mxu0 0
    %506 = vmatpush1.bf16.msra.mxu0 %v377
    %507 = vmatprep.subr.bf16.mxu0 0
    %508 = vmatpush1.bf16.msra.mxu0 %v376
    %509 = vmatprep.subr.bf16.mxu0 0
    %510 = vmatpush1.bf16.msra.mxu0 %v375
    %511 = vmatprep.subr.bf16.mxu0 0
    %512 = vmatpush1.bf16.msra.mxu0 %v374
    %513 = vmatprep.subr.bf16.mxu0 0
    %514 = vmatpush1.bf16.msra.mxu0 %v373
    %515 = vmatprep.subr.bf16.mxu0 0
    %516 = vmatpush2.bf16.msra.mxu0 %v388
    %517 = vmatprep.subr.bf16.mxu0 0
    %518 = vmatpush2.bf16.msra.mxu0 %v387
    %519 = vmatprep.subr.bf16.mxu0 0
    %520 = vmatpush2.bf16.msra.mxu0 %v386
    %521 = vmatprep.subr.bf16.mxu0 0
    %522 = vmatpush2.bf16.msra.mxu0 %v385
    %523 = vmatprep.subr.bf16.mxu0 0
    %524 = vmatpush2.bf16.msra.mxu0 %v384
    %525 = vmatprep.subr.bf16.mxu0 0
    %526 = vmatpush2.bf16.msra.mxu0 %v383
    %527 = vmatprep.subr.bf16.mxu0 0
    %528 = vmatpush2.bf16.msra.mxu0 %v382
    %529 = vmatprep.subr.bf16.mxu0 0
    %530 = vmatpush2.bf16.msra.mxu0 %v381
    %531 = vmatprep.mubr.bf16.mxu0 %v52
    %532 = vmatmul.mubr.bf16.gmra.mxu0 %v51
    %v533 = vpop.f32.mrf.mxu0
    %v534 = vadd.f32 %v494, %v533
    %v535 = vpop.f32.mrf.mxu0
    %v536 = vpop.f32.mrf.mxu0
    %v537 = vpop.f32.mrf.mxu0
    %538 = vdwg.mxu0
    %539 = vmatprep.subr.bf16.mxu0 0
    %540 = vmatpush1.bf16.msra.mxu0 %v396
    %541 = vmatprep.subr.bf16.mxu0 0
    %542 = vmatpush1.bf16.msra.mxu0 %v395
    %543 = vmatprep.subr.bf16.mxu0 0
    %544 = vmatpush1.bf16.msra.mxu0 %v394
    %545 = vmatprep.subr.bf16.mxu0 0
    %546 = vmatpush1.bf16.msra.mxu0 %v393
    %547 = vmatprep.subr.bf16.mxu0 0
    %548 = vmatpush1.bf16.msra.mxu0 %v392
    %549 = vmatprep.subr.bf16.mxu0 0
    %550 = vmatpush1.bf16.msra.mxu0 %v391
    %551 = vmatprep.subr.bf16.mxu0 0
    %552 = vmatpush1.bf16.msra.mxu0 %v390
    %553 = vmatprep.subr.bf16.mxu0 0
    %554 = vmatpush1.bf16.msra.mxu0 %v389
    %555 = vmatprep.subr.bf16.mxu0 0
    %556 = vmatpush2.bf16.msra.mxu0 %v404
    %557 = vmatprep.subr.bf16.mxu0 0
    %558 = vmatpush2.bf16.msra.mxu0 %v403
    %559 = vmatprep.subr.bf16.mxu0 0
    %560 = vmatpush2.bf16.msra.mxu0 %v402
    %561 = vmatprep.subr.bf16.mxu0 0
    %562 = vmatpush2.bf16.msra.mxu0 %v401
    %563 = vmatprep.subr.bf16.mxu0 0
    %564 = vmatpush2.bf16.msra.mxu0 %v400
    %565 = vmatprep.subr.bf16.mxu0 0
    %566 = vmatpush2.bf16.msra.mxu0 %v399
    %567 = vmatprep.subr.bf16.mxu0 0
    %568 = vmatpush2.bf16.msra.mxu0 %v398
    %569 = vmatprep.subr.bf16.mxu0 0
    %570 = vmatpush2.bf16.msra.mxu0 %v397
    %571 = vmatprep.mubr.bf16.mxu0 %v54
    %572 = vmatmul.mubr.bf16.gmra.mxu0 %v53
    %v573 = vpop.f32.mrf.mxu0
    %v574 = vadd.f32 %v534, %v573
    %v575 = vpop.f32.mrf.mxu0
    %v576 = vpop.f32.mrf.mxu0
    %v577 = vpop.f32.mrf.mxu0
    %578 = vdwg.mxu0
    %579 = vmatprep.subr.bf16.mxu0 0
    %580 = vmatpush1.bf16.msra.mxu0 0
    %581 = vmatprep.subr.bf16.mxu0 0
    %582 = vmatpush1.bf16.msra.mxu0 0
    %583 = vmatprep.subr.bf16.mxu0 0
    %584 = vmatpush1.bf16.msra.mxu0 0
    %585 = vmatprep.subr.bf16.mxu0 0
    %586 = vmatpush1.bf16.msra.mxu0 0
    %587 = vmatprep.subr.bf16.mxu0 0
    %588 = vmatpush1.bf16.msra.mxu0 0
    %589 = vmatprep.subr.bf16.mxu0 0
    %590 = vmatpush1.bf16.msra.mxu0 0
    %591 = vmatprep.subr.bf16.mxu0 0
    %592 = vmatpush1.bf16.msra.mxu0 0
    %593 = vmatprep.subr.bf16.mxu0 0
    %594 = vmatpush1.bf16.msra.mxu0 %v405
    %595 = vmatprep.subr.bf16.mxu0 0
    %596 = vmatpush2.bf16.msra.mxu0 0
    %597 = vmatprep.subr.bf16.mxu0 0
    %598 = vmatpush2.bf16.msra.mxu0 0
    %599 = vmatprep.subr.bf16.mxu0 0
    %600 = vmatpush2.bf16.msra.mxu0 0
    %601 = vmatprep.subr.bf16.mxu0 0
    %602 = vmatpush2.bf16.msra.mxu0 0
    %603 = vmatprep.subr.bf16.mxu0 0
    %604 = vmatpush2.bf16.msra.mxu0 0
    %605 = vmatprep.subr.bf16.mxu0 0
    %606 = vmatpush2.bf16.msra.mxu0 0
    %607 = vmatprep.subr.bf16.mxu0 0
    %608 = vmatpush2.bf16.msra.mxu0 0
    %609 = vmatprep.subr.bf16.mxu0 0
    %610 = vmatpush2.bf16.msra.mxu0 0
    %611 = vmatprep.mubr.bf16.mxu0 0
    %612 = vmatmul.mubr.bf16.gmra.mxu0 %v457
    %v613 = vpop.f32.mrf.mxu0
    %v614 = vadd.f32 %v574, %v613
    %v615 = vpop.f32.mrf.mxu0
    %v616 = vpop.f32.mrf.mxu0
    %v617 = vpop.f32.mrf.mxu0
    %618 = vdwg.mxu0
    %vm619 = vcmask 80896
    %620 = vst.msk [vmem:[#allocation7] sm:$0xff] %vm619, %v614
    // Predicated region
    $region22: #{softmax_regression_forward_prepped.1} parent=1 // pred_check
      _
    $region23: #{softmax_regression_forward_prepped.1} parent=1 // pred_check_branch
      %622 = sbr.rel (0) target = $region25
    $region24: #{softmax_regression_forward_prepped.1} parent=1 // pred_region
      %s624 = ssub.s32 128, 128
      %625 = vsyncadd [#allocation4], %s624
      %s627 = sshll.u32 [#allocation7], 4
      %s628 = int_to_ptr.vmem [resolvable:$true] %s627
      %630 = dma.vmem_to_hbm [thread:$0]  %s628, 128, %s3, [#allocation4]
    $region25: #{softmax_regression_forward_prepped.1} parent=1 // pred_fallthru
      _
    // Predicated region
    $region26: #{softmax_regression_forward_prepped.1} parent=1 // pred_check
      _
    $region27: #{softmax_regression_forward_prepped.1} parent=1 // pred_check_branch
      %632 = sbr.rel (0) target = $region29
    $region28: #{softmax_regression_forward_prepped.1} parent=1 // pred_region
      %633 = dma.done [#allocation4], 128
    $region29: #{softmax_regression_forward_prepped.1} parent=1 // pred_fallthru
      _
    %634 = vsyncpa [#allocation3], 1
    %635 = vsyncpa [#allocation6], 1
    %636 = vsyncpa [#allocation4], 1

</llo_original>
